<compile_context>
chip_gen: v5e
topology: v5e:2x2
jax: 0.10.0
libtpu: 0.0.40
codegen_flags: <defaults>
</compile_context>

<pallas_src>
import functools

import jax
import jax.numpy as jnp
from jax.experimental import pallas as pl
from jax.experimental.pallas import tpu as pltpu


def _focal_loss_kernel(p_ref, t_ref, out_ref, acc_ref, *,
                       gamma, valid_rows, hard_targets):
    i = pl.program_id(0)

    @pl.when(i == 0)
    def _():
        acc_ref[...] = jnp.zeros_like(acc_ref)

    p = p_ref[...].astype(jnp.float32)
    t = t_ref[...].astype(jnp.float32)
    tr, ln = p.shape

    # Mask the garbage region of the partial tail block (static check: only
    # emitted when a partial block can exist). Masked elements are replaced by
    # (p=1, t=1), which contributes exactly zero focal loss — but ONLY because
    # the logs below are clamped at -100 before being multiplied by (1-t)=0;
    # removing the clamp would turn the padding into 0 * -inf = NaN.
    if valid_rows % tr != 0:
        row_ids = i * tr + jax.lax.broadcasted_iota(jnp.int32, (tr, ln), 0)
        in_bounds = row_ids < valid_rows
        p = jnp.where(in_bounds, p, 1.0)
        t = jnp.where(in_bounds, t, 1.0)

    p_t = p * t + (1.0 - p) * (1.0 - t)

    if hard_targets:
        # Hard labels t in {0,1}: bce == -clamp(log(p_t), -100).
        # One EUP log per element instead of two, and no t/(1-t) blend.
        bce = -jnp.maximum(jnp.log(p_t), -100.0)
    else:
        # General (soft-target) path, matching F.binary_cross_entropy which
        # clamps each log term at -100.
        log_p = jnp.maximum(jnp.log(p), -100.0)
        log_1mp = jnp.maximum(jnp.log(1.0 - p), -100.0)
        bce = -(t * log_p + (1.0 - t) * log_1mp)

    m = jnp.maximum(1.0 - p_t, 0.0)  # clamp guards rounding making p_t > 1

    g_int = int(gamma)
    if float(g_int) == float(gamma) and g_int >= 0:
        # Integer gamma: repeated multiply on the VPU (no exp/log pow on EUP).
        mod = jnp.ones_like(m) if g_int == 0 else m
        for _ in range(max(g_int - 1, 0)):
            mod = mod * m
    else:
        mod = m ** gamma

    loss = mod * bce  # alpha is hoisted to the wrapper epilogue

    # Sublane-fold the (tile_rows, lanes) tile into the (8, lanes) accumulator:
    # pure VALU adds on the hot path, no per-step cross-lane reduction.
    acc_ref[...] += loss.reshape(tr // 8, 8, ln).sum(axis=0)

    @pl.when(i == pl.num_programs(0) - 1)
    def _():
        out_ref[0, 0] = jnp.sum(acc_ref[...])


def _round_up(x, m):
    return ((x + m - 1) // m) * m


def _sublane_multiple(dtype):
    # Native sublane tile: 8 for 4-byte, 16 for 2-byte, 32 for 1-byte dtypes.
    return 8 * max(1, 4 // jnp.dtype(dtype).itemsize)


def focal_loss(inputs, targets, *, alpha=1.0, gamma=2.0, reduction="mean",
               hard_targets=False, tile_rows=4096, lanes=128):
    """Pallas focal loss. `inputs` are probabilities in (0, 1], same shape as `targets`.

    Any shape / any float dtype; data streams through in the caller's dtype and
    is reduced in f32. With `hard_targets=True` (targets must be exactly 0/1),
    targets stream as int8 and BCE uses the single-log fast path.
    """
    assert inputs.shape == targets.shape
    total = inputs.size
    assert total > 0

    p_flat = inputs.reshape(-1)
    if hard_targets:
        # Narrow the targets stream: {0,1} is exact in int8 -> less HBM traffic.
        t_flat = targets.reshape(-1).astype(jnp.int8)
    else:
        t_flat = targets.reshape(-1)

    # Pad only to a lane multiple (<=127 elements, value (p=1,t=1) -> zero
    # loss); the ragged tail rows of the last block are masked in-kernel, so
    # no fully padded copy of the flattened array is materialised.
    total_padded = _round_up(total, lanes)
    if total_padded != total:
        pad = total_padded - total
        p_flat = jnp.pad(p_flat, (0, pad), constant_values=1)
        t_flat = jnp.pad(t_flat, (0, pad), constant_values=1)
    rows = total_padded // lanes

    sub = max(_sublane_multiple(p_flat.dtype), _sublane_multiple(t_flat.dtype))
    tile_rows_eff = min(_round_up(tile_rows, sub), _round_up(rows, sub))
    nblocks = pl.cdiv(rows, tile_rows_eff)

    p2d = p_flat.reshape(rows, lanes)
    t2d = t_flat.reshape(rows, lanes)

    kernel = functools.partial(
        _focal_loss_kernel, gamma=float(gamma), valid_rows=rows,
        hard_targets=bool(hard_targets))

    # TODO(synk): on v7x, shard the block axis across both TensorCores
    # (CORE_PARALLEL / pl.core_map) once verified with an xprof trace.
    total_sum = pl.pallas_call(
        kernel,
        out_shape=jax.ShapeDtypeStruct((1, 1), jnp.float32),
        grid_spec=pltpu.PrefetchScalarGridSpec(
            num_scalar_prefetch=0,
            grid=(nblocks,),
            in_specs=[
                pl.BlockSpec((tile_rows_eff, lanes), lambda i: (i, 0)),
                pl.BlockSpec((tile_rows_eff, lanes), lambda i: (i, 0)),
            ],
            out_specs=pl.BlockSpec((1, 1), lambda i: (0, 0),
                                   memory_space=pltpu.MemorySpace.SMEM),
            scratch_shapes=[pltpu.VMEM((8, lanes), jnp.float32)],
        ),
        compiler_params=pltpu.CompilerParams(
            dimension_semantics=("arbitrary",),
            vmem_limit_bytes=32 * 1024 * 1024,
        ),
    )(p2d, t2d)

    result = jnp.float32(alpha) * total_sum[0, 0]
    if reduction == "mean":
        result = result / jnp.float32(total)
    return result


def focal_loss_ref(inputs, targets, alpha=1.0, gamma=2.0, reduction="mean"):
    p = inputs.astype(jnp.float32)
    t = targets.astype(jnp.float32)
    bce = -(t * jnp.maximum(jnp.log(p), -100.0)
            + (1.0 - t) * jnp.maximum(jnp.log(1.0 - p), -100.0))
    p_t = p * t + (1.0 - p) * (1.0 - t)
    loss = alpha * (1.0 - p_t) ** gamma * bce
    return loss.mean() if reduction == "mean" else loss.sum()


if __name__ == "__main__":
    key = jax.random.PRNGKey(0)
    k1, k2, k3, k4 = jax.random.split(key, 4)

    # Small NCHW probability map and binary targets: (2, 4, 16, 16) -> 2048 elems.
    x_shape = (2, 4, 16, 16)
    logits = jax.random.normal(k1, x_shape, dtype=jnp.float32)
    inputs = jax.nn.sigmoid(logits)                       # probabilities in (0, 1)
    targets = (jax.random.uniform(k2, x_shape) > 0.5).astype(jnp.float32)

    ref = focal_loss_ref(inputs, targets, alpha=1.0, gamma=2.0, reduction="mean")

    # General (soft-target) path.
    out = jax.block_until_ready(
        focal_loss(inputs, targets, alpha=1.0, gamma=2.0, reduction="mean"))
    assert jnp.allclose(out, ref, rtol=1e-5, atol=1e-6), (out, ref)

    # Hard-label fast path (int8 targets stream, single-log BCE).
    out_h = jax.block_until_ready(
        focal_loss(inputs, targets, alpha=1.0, gamma=2.0, reduction="mean",
                   hard_targets=True))
    assert jnp.allclose(out_h, ref, rtol=1e-5, atol=1e-6), (out_h, ref)

    # Ragged shape exercising lane padding + in-kernel tail masking + 'sum'.
    y_shape = (3, 5, 7)
    logits2 = jax.random.normal(k3, y_shape, dtype=jnp.float32)
    inputs2 = jax.nn.sigmoid(logits2)
    targets2 = (jax.random.uniform(k4, y_shape) > 0.5).astype(jnp.float32)
    ref2 = focal_loss_ref(inputs2, targets2, alpha=1.0, gamma=2.0, reduction="sum")
    out2 = jax.block_until_ready(
        focal_loss(inputs2, targets2, alpha=1.0, gamma=2.0, reduction="sum"))
    assert jnp.allclose(out2, ref2, rtol=1e-5, atol=1e-6), (out2, ref2)
    out2_h = jax.block_until_ready(
        focal_loss(inputs2, targets2, alpha=1.0, gamma=2.0, reduction="sum",
                   hard_targets=True))
    assert jnp.allclose(out2_h, ref2, rtol=1e-5, atol=1e-6), (out2_h, ref2)

    print("KERNEL_OK")
</pallas_src>

<mosaic_0001>
module attributes {stable_mosaic.version = 11 : i64} {
  func.func @_focal_loss_kernel(%arg0: i32, %arg1: memref<16x128xf32, #tpu.memory_space<vmem>>, %arg2: memref<16x128xf32, #tpu.memory_space<vmem>>, %arg3: memref<1x1xf32, #tpu.memory_space<smem>>, %arg4: memref<8x128xf32, #tpu.memory_space<vmem>>) attributes {dimension_semantics = [#tpu.dimension_semantics<arbitrary>], iteration_bounds = array<i64: 1>, scalar_prefetch = 0 : i64, scratch_operands = 1 : i64, tpu.core_type = #tpu.core_type<tc>, window_params = [{transform_indices = @transform_0, window_bounds = array<i64: 16, 128>}, {transform_indices = @transform_1, window_bounds = array<i64: 16, 128>}, {transform_indices = @transform_2, window_bounds = array<i64: 1, 1>}]} {
    %c0_i32 = arith.constant 0 : i32
    %0 = arith.cmpi eq, %arg0, %c0_i32 : i32
    %1 = arith.extui %0 : i1 to i32
    %c0_i32_0 = arith.constant 0 : i32
    %2 = arith.cmpi ne, %1, %c0_i32_0 : i32
    scf.if %2 {
      %cst_19 = arith.constant 0.000000e+00 : f32
      %41 = vector.broadcast %cst_19 : f32 to vector<8x128xf32>
      %c0_20 = arith.constant 0 : index
      %c0_21 = arith.constant 0 : index
      %42 = vector.load %arg4[%c0_20, %c0_21] : memref<8x128xf32, #tpu.memory_space<vmem>>, vector<8x128xf32>
      tpu.vector_store %arg4[%c0_20, %c0_21], %41 {strides = array<i32>} : memref<8x128xf32, #tpu.memory_space<vmem>>, vector<8x128xf32>,
    } else {
    }
    %c0 = arith.constant 0 : index
    %c0_1 = arith.constant 0 : index
    %3 = vector.load %arg1[%c0, %c0_1] : memref<16x128xf32, #tpu.memory_space<vmem>>, vector<16x128xf32>
    %c0_2 = arith.constant 0 : index
    %c0_3 = arith.constant 0 : index
    %4 = vector.load %arg2[%c0_2, %c0_3] : memref<16x128xf32, #tpu.memory_space<vmem>>, vector<16x128xf32>
    %5 = arith.mulf %3, %4 : vector<16x128xf32>
    %cst = arith.constant 1.000000e+00 : f32
    %6 = vector.broadcast %cst : f32 to vector<16x128xf32>
    %7 = arith.subf %6, %3 : vector<16x128xf32>
    %cst_4 = arith.constant 1.000000e+00 : f32
    %8 = vector.broadcast %cst_4 : f32 to vector<16x128xf32>
    %9 = arith.subf %8, %4 : vector<16x128xf32>
    %10 = arith.mulf %7, %9 : vector<16x128xf32>
    %11 = arith.addf %5, %10 : vector<16x128xf32>
    %12 = math.log %3 : vector<16x128xf32>
    %cst_5 = arith.constant -1.000000e+02 : f32
    %13 = vector.broadcast %cst_5 : f32 to vector<16x128xf32>
    %14 = arith.maximumf %12, %13 : vector<16x128xf32>
    %cst_6 = arith.constant 1.000000e+00 : f32
    %15 = vector.broadcast %cst_6 : f32 to vector<16x128xf32>
    %16 = arith.subf %15, %3 : vector<16x128xf32>
    %17 = math.log %16 : vector<16x128xf32>
    %cst_7 = arith.constant -1.000000e+02 : f32
    %18 = vector.broadcast %cst_7 : f32 to vector<16x128xf32>
    %19 = arith.maximumf %17, %18 : vector<16x128xf32>
    %20 = arith.mulf %4, %14 : vector<16x128xf32>
    %cst_8 = arith.constant 1.000000e+00 : f32
    %21 = vector.broadcast %cst_8 : f32 to vector<16x128xf32>
    %22 = arith.subf %21, %4 : vector<16x128xf32>
    %23 = arith.mulf %22, %19 : vector<16x128xf32>
    %24 = arith.addf %20, %23 : vector<16x128xf32>
    %cst_9 = arith.constant 0.000000e+00 : f32
    %25 = vector.broadcast %cst_9 : f32 to vector<16x128xf32>
    %26 = arith.subf %25, %24 : vector<16x128xf32>
    %cst_10 = arith.constant 1.000000e+00 : f32
    %27 = vector.broadcast %cst_10 : f32 to vector<16x128xf32>
    %28 = arith.subf %27, %11 : vector<16x128xf32>
    %cst_11 = arith.constant 0.000000e+00 : f32
    %29 = vector.broadcast %cst_11 : f32 to vector<16x128xf32>
    %30 = arith.maximumf %28, %29 : vector<16x128xf32>
    %31 = arith.mulf %30, %30 : vector<16x128xf32>
    %32 = arith.mulf %31, %26 : vector<16x128xf32>
    %c0_12 = arith.constant 0 : index
    %c0_13 = arith.constant 0 : index
    %33 = vector.load %arg4[%c0_12, %c0_13] : memref<8x128xf32, #tpu.memory_space<vmem>>, vector<8x128xf32>
    %34 = vector.shape_cast %32 : vector<16x128xf32> to vector<2x8x128xf32>
    %cst_14 = arith.constant dense<0.000000e+00> : vector<8x128xf32>
    %35 = vector.multi_reduction <add>, %34, %cst_14 [0] : vector<2x8x128xf32> to vector<8x128xf32>
    %36 = arith.addf %33, %35 : vector<8x128xf32>
    %c0_15 = arith.constant 0 : index
    %c0_16 = arith.constant 0 : index
    %37 = vector.load %arg4[%c0_15, %c0_16] : memref<8x128xf32, #tpu.memory_space<vmem>>, vector<8x128xf32>
    tpu.vector_store %arg4[%c0_15, %c0_16], %36 {strides = array<i32>} : memref<8x128xf32, #tpu.memory_space<vmem>>, vector<8x128xf32>,
    %c0_i32_17 = arith.constant 0 : i32
    %38 = arith.cmpi eq, %arg0, %c0_i32_17 : i32
    %39 = arith.extui %38 : i1 to i32
    %c0_i32_18 = arith.constant 0 : i32
    %40 = arith.cmpi ne, %39, %c0_i32_18 : i32
    scf.if %40 {
      %c0_19 = arith.constant 0 : index
      %c0_20 = arith.constant 0 : index
      %41 = vector.load %arg4[%c0_19, %c0_20] : memref<8x128xf32, #tpu.memory_space<vmem>>, vector<8x128xf32>
      %42 = vector.shape_cast %41 : vector<8x128xf32> to vector<1x8x128xf32>
      %cst_21 = arith.constant dense<0.000000e+00> : vector<1xf32>
      %43 = vector.multi_reduction <add>, %42, %cst_21 [1, 2] : vector<1x8x128xf32> to vector<1xf32>
      %44 = vector.shape_cast %43 : vector<1xf32> to vector<1x1x1xf32>
      %45 = vector.extract %44[0, 0, 0] : f32 from vector<1x1x1xf32>
      %c0_22 = arith.constant 0 : index
      %c0_23 = arith.constant 0 : index
      %46 = memref.load %arg3[%c0_22, %c0_23] : memref<1x1xf32, #tpu.memory_space<smem>>
      memref.store %45, %arg3[%c0_22, %c0_23] : memref<1x1xf32, #tpu.memory_space<smem>>
    } else {
    }
    return
  }
  func.func @transform_0(%arg0: i32) -> (i32, i32) {
    %c0_i32 = arith.constant 0 : i32
    %c0_i32_0 = arith.constant 0 : i32
    return %arg0, %c0_i32 : i32, i32
  }
  func.func @transform_1(%arg0: i32) -> (i32, i32) {
    %c0_i32 = arith.constant 0 : i32
    %c0_i32_0 = arith.constant 0 : i32
    return %arg0, %c0_i32 : i32, i32
  }
  func.func @transform_2(%arg0: i32) -> (i32, i32) {
    %c0_i32 = arith.constant 0 : i32
    %c0_i32_0 = arith.constant 0 : i32
    %c0_i32_1 = arith.constant 0 : i32
    return %c0_i32, %c0_i32_0 : i32, i32
  }
}

</mosaic_0001>

<llo_original>
// kernel: tpu_custom_call.1
$region0: #{tpu_custom_call.1}
  #allocation0 [shape = 'u32[]', space=smem, size = 0x4, offset = 0x4, fixed_abs, tag = 'smem constant byte address 0x4 - core index']
  #allocation1 [shape = 'u32[72,128]{1,0:T(1,128)}', space=vmem, size = 0x9000, scoped, tag = 'internal scratch']
  #allocation2 [shape = 'f32[8,128]{1,0:T(8,128)}', space=vmem, size = 0x1000, scoped, tag = 'scratch operand']
  %s0 = inlined_call_operand.hbm [shape: f32[16,128], index: 0, kind: input, shape index: {}]
  %s1 = inlined_call_operand.hbm [shape: f32[16,128], index: 1, kind: input, shape index: {}]
  %s2 = inlined_call_operand.hbm [shape: f32[1,1], index: 2, kind: output, shape index: {}]
  %s3 = sld [smem:[#allocation0]]
  $region34: #{tpu_custom_call.1} parent=0
    _
  %s5 = ssub.s32 1, %s3
  %s6 = scalar_select 0, %s5, %s3
  $region1: #{tpu_custom_call.1} parent=0
    #allocation3 [shape = 'u8[8192]{0}', space=vmem, size = 0x2000, scoped, tag = 'input window, operand 0, single buffered']
    #allocation4 [shape = 's32[1]{0}', space=sflag, size = 0x4, scoped, tag = 'scoped memory for tpu_custom_call.1']
    #allocation5 [shape = 's32[1]{0}', space=sflag, size = 0x4, scoped, tag = 'scoped memory for tpu_custom_call.1']
    #allocation6 [shape = 'u8[8192]{0}', space=vmem, size = 0x2000, scoped, tag = 'input window, operand 1, single buffered']
    #allocation7 [shape = 's32[1]{0}', space=sflag, size = 0x4, scoped, tag = 'scoped memory for tpu_custom_call.1']
    #allocation8 [shape = 'u8[512]{0}', space=smem, size = 0x200, scoped, tag = 'output window, operand 0, single buffered']
    %7 = vsyncpa [#allocation4], 0
    %8 = vsyncpa [#allocation7], 0
    %9 = vsyncpa [#allocation5], 0
    // Predicated region
    $region2: #{tpu_custom_call.1} parent=1 // pred_check
      _
    $region3: #{tpu_custom_call.1} parent=1 // pred_check_branch
      %11 = sbr.rel (0) target = $region5
    $region4: #{tpu_custom_call.1} parent=1 // pred_region
      %13 = vsyncadd [#allocation4], 0
      %s14 = sshll.u32 %s0, 4
      %s15 = int_to_ptr.hbm [resolvable:$true] %s14
      %s16 = sshll.u32 [#allocation3], 4
      %s17 = int_to_ptr.vmem [resolvable:$true] %s16
      %22 = dma.hbm_to_vmem [thread:$0]  %s15, 256, %s17, [#allocation4], 128, 128, 8
    $region5: #{tpu_custom_call.1} parent=1 // pred_fallthru
      _
    // Predicated region
    $region6: #{tpu_custom_call.1} parent=1 // pred_check
      _
    $region7: #{tpu_custom_call.1} parent=1 // pred_check_branch
      %24 = sbr.rel (0) target = $region9
    $region8: #{tpu_custom_call.1} parent=1 // pred_region
      %26 = vsyncadd [#allocation7], 0
      %s27 = sshll.u32 %s1, 4
      %s28 = int_to_ptr.hbm [resolvable:$true] %s27
      %s29 = sshll.u32 [#allocation6], 4
      %s30 = int_to_ptr.vmem [resolvable:$true] %s29
      %35 = dma.hbm_to_vmem [thread:$0]  %s28, 256, %s30, [#allocation7], 128, 128, 8
    $region9: #{tpu_custom_call.1} parent=1 // pred_fallthru
      _
    // Predicated region
    $region10: #{tpu_custom_call.1} parent=1 // pred_check
      _
    $region11: #{tpu_custom_call.1} parent=1 // pred_check_branch
      %37 = sbr.rel (0) target = $region13
    $region12: #{tpu_custom_call.1} parent=1 // pred_region
      %39 = dma.done [#allocation4], 256
    $region13: #{tpu_custom_call.1} parent=1 // pred_fallthru
      _
    // Predicated region
    $region14: #{tpu_custom_call.1} parent=1 // pred_check
      _
    $region15: #{tpu_custom_call.1} parent=1 // pred_check_branch
      %41 = sbr.rel (0) target = $region17
    $region16: #{tpu_custom_call.1} parent=1 // pred_region
      %43 = dma.done [#allocation7], 256
    $region17: #{tpu_custom_call.1} parent=1 // pred_fallthru
      _
    %p44 = scmp.eq.s32.totalorder 0, 0
    // Predicated region
    $region18: #{tpu_custom_call.1} parent=1 // pred_check
      %p45 = pneg %p44
    $region19: #{tpu_custom_call.1} parent=1 // pred_check_branch
      %47 = sbr.rel (%p45) target = $region21
    $region20: #{tpu_custom_call.1} parent=1 // pred_region
      %48 = vst [vmem:[#allocation2] sm:$0xff] 0.0
    $region21: #{tpu_custom_call.1} parent=1 // pred_fallthru
      _
    %v49 = vld [vmem:[#allocation3] sm:$0xff]
    %v50 = vld [vmem:[#allocation3 + $0x8] sm:$0xff]
    %v51 = vld [vmem:[#allocation6] sm:$0xff]
    %v52 = vld [vmem:[#allocation6 + $0x8] sm:$0xff]
    %v53 = vmul.f32 %v49, %v51
    %v54 = vmul.f32 %v50, %v52
    %v55 = vsub.f32 1.0, %v49
    %v56 = vsub.f32 1.0, %v50
    %v57 = vsub.f32 1.0, %v51
    %v58 = vsub.f32 1.0, %v52
    %v59 = vmul.f32 %v55, %v57
    %v60 = vmul.f32 %v56, %v58
    %v61 = vadd.f32 %v53, %v59
    %v62 = vadd.f32 %v54, %v60
    %v63 = vlog2.pop %v49
    %v64 = vmul.f32 %v63, 0.6931472
    %v65 = vlog2.pop %v50
    %v66 = vmul.f32 %v65, 0.6931472
    %v67 = vmax.f32 %v64, -100.0
    %v68 = vmax.f32 %v66, -100.0
    %v69 = vlog2.pop %v55
    %v70 = vmul.f32 %v69, 0.6931472
    %v71 = vlog2.pop %v56
    %v72 = vmul.f32 %v71, 0.6931472
    %v73 = vmax.f32 %v70, -100.0
    %v74 = vmax.f32 %v72, -100.0
    %v75 = vmul.f32 %v51, %v67
    %v76 = vmul.f32 %v52, %v68
    %v77 = vmul.f32 %v57, %v73
    %v78 = vmul.f32 %v58, %v74
    %v79 = vadd.f32 %v75, %v77
    %v80 = vadd.f32 %v76, %v78
    %v81 = vsub.f32 0.0, %v79
    %v82 = vsub.f32 0.0, %v80
    %v83 = vsub.f32 1.0, %v61
    %v84 = vsub.f32 1.0, %v62
    %v85 = vmax.f32 %v83, 0.0
    %v86 = vmax.f32 %v84, 0.0
    %v87 = vmul.f32 %v85, %v85
    %v88 = vmul.f32 %v86, %v86
    %v89 = vmul.f32 %v87, %v81
    %v90 = vmul.f32 %v88, %v82
    %v91 = vld [vmem:[#allocation2] sm:$0xff]
    %v92 = vadd.f32 %v89, %v90
    %v93 = vadd.f32 %v91, %v92
    %94 = vst [vmem:[#allocation2] sm:$0xff] %v93
    // Predicated region
    $region22: #{tpu_custom_call.1} parent=1 // pred_check
      %p95 = pneg %p44
    $region23: #{tpu_custom_call.1} parent=1 // pred_check_branch
      %97 = sbr.rel (%p95) target = $region25
    $region24: #{tpu_custom_call.1} parent=1 // pred_region
      %v98 = vld [vmem:[#allocation2] sm:$0xff]
      %99 = vadd.xlane.f32.xlu0 %v98
      %v100 = vpop.xlane.xlu0 %99
      %v101 = vrot.slane %v100, 4
      %v102 = vadd.f32 %v100, %v101
      %v103 = vrot.slane %v102, 2
      %v104 = vadd.f32 %v102, %v103
      %v105 = vrot.slane %v104, 1
      %v106 = vadd.f32 %v104, %v105
      %s107 = vtos %v106
      %s108 = scalar_lea.smem [#allocation8], 0
      %109 = sst [smem:[%s108]] %s107
    $region25: #{tpu_custom_call.1} parent=1 // pred_fallthru
      _
    // Predicated region
    $region26: #{tpu_custom_call.1} parent=1 // pred_check
      _
    $region27: #{tpu_custom_call.1} parent=1 // pred_check_branch
      %111 = sbr.rel (0) target = $region29
    $region28: #{tpu_custom_call.1} parent=1 // pred_region
      %113 = vsyncadd [#allocation5], 0
      %s115 = sshll.u32 %s2, 4
      %s116 = int_to_ptr.hbm [resolvable:$true] %s115
      %118 = dma.smem_to_hbm [#allocation8], 16, %s116, [#allocation5]
    $region29: #{tpu_custom_call.1} parent=1 // pred_fallthru
      _
    // Predicated region
    $region30: #{tpu_custom_call.1} parent=1 // pred_check
      _
    $region31: #{tpu_custom_call.1} parent=1 // pred_check_branch
      %120 = sbr.rel (0) target = $region33
    $region32: #{tpu_custom_call.1} parent=1 // pred_region
      %122 = dma.done [#allocation5], 16
    $region33: #{tpu_custom_call.1} parent=1 // pred_fallthru
      _
    %123 = sfence
    %124 = vsyncpa [#allocation4], 1
    %125 = vsyncpa [#allocation7], 1
    %126 = vsyncpa [#allocation5], 1

</llo_original>
